<compile_context>
chip_gen: v7x
topology: tpu7x:2x2x1
jax: 0.10.0
libtpu: 0.0.40
codegen_flags: <defaults>
</compile_context>

<pallas_src>
import functools

import jax
import jax.numpy as jnp
from jax.experimental import pallas as pl
from jax.experimental.pallas import tpu as pltpu


def _round_up(x: int, m: int) -> int:
    return ((x + m - 1) // m) * m


def fm_kernel(idx_ref, tab_ref, bias_ref, o_ref, *, embed_dim):
    """One batch tile of the FM forward, with the embedding/linear gather fused in.

    idx_ref : (F, TB)  int32   -- offset-adjusted (global) feature ids, lane-dense
    tab_ref : (R, V)   float32 -- augmented transposed table; column v holds
                                  [emb_v (D) | ||emb_v||^2 | w_v | zero pad]
    bias_ref: (1,)     float32 -- SMEM scalar
    o_ref   : (1, TB)  float32 -- sigmoid(FM score), lane-dense
    """
    num_fields, tb = idx_ref.shape
    v = tab_ref.shape[1]
    d = embed_dim

    # Multi-hot (V, TB): fields occupy disjoint global vocab ranges, so the sum of the
    # per-field one-hots is exactly the row's multi-hot encoding.
    vocab = jax.lax.broadcasted_iota(jnp.int32, (v, tb), 0)
    mh = jnp.zeros((v, tb), jnp.float32)
    for f in range(num_fields):                                   # static, F is tiny
        mh = mh + (vocab == idx_ref[f:f + 1, :]).astype(jnp.float32)
    # TODO(synk): restrict each field's compare to its own (8-aligned) vocab sub-range
    # to cut the VPU compare work ~F x once this becomes the visible bottleneck.

    # One MXU matmul replaces the gather: r[c, b] = sum_f table[c, gidx[f, b]].
    r = jnp.dot(tab_ref[...], mh, preferred_element_type=jnp.float32)   # (R, TB)

    e_sum = r[:d, :]               # sum_f e_f           (D, TB)
    ssq = r[d:d + 1, :]            # sum_f ||e_f||^2     (1, TB)
    lin = r[d + 1:d + 2, :]        # sum_f w_f           (1, TB)

    # FactorizationMachine(reduce_sum=True): 0.5 * sum_d[(sum_f e)^2 - sum_f e^2]
    ix = 0.5 * (jnp.sum(e_sum * e_sum, axis=0, keepdims=True) - ssq)
    o_ref[...] = jax.nn.sigmoid(lin + ix + bias_ref[0])


def prepare_fm_params(emb_table, lin_table, field_dims, *, vocab_align=128):
    """Build the augmented, transposed, padded parameter table once (model init time).

    Returns:
      tab_t  : (round_up(D+2, 8), round_up(total, 128)) float32
               rows = [emb dims 0..D-1, per-row ||emb||^2, linear weight, zero pad]
      offsets: (F,) int32 cumulative field offsets
    """
    total, d = emb_table.shape
    assert total == sum(field_dims)
    v = _round_up(max(total, vocab_align), vocab_align)
    rows = _round_up(d + 2, 8)
    sqnorm = jnp.sum(emb_table * emb_table, axis=1, keepdims=True)     # (total, 1)
    aug = jnp.concatenate([emb_table, sqnorm, lin_table], axis=1)      # (total, D+2)
    aug = jnp.pad(aug, ((0, v - total), (0, rows - (d + 2))))
    tab_t = jnp.asarray(aug.T, dtype=jnp.float32)                      # (rows, V)

    offs = [0]
    for fd in field_dims[:-1]:
        offs.append(offs[-1] + fd)
    offsets = jnp.array(offs, dtype=jnp.int32)
    return tab_t, offsets


def fm_forward(x_idx, tab_t, bias, offsets, *, embed_dim, max_tile_b: int = 8192):
    """Full FactorizationMachineModel forward.

    x_idx  : (B, F) int32 raw per-field indices
    tab_t  : augmented transposed table from prepare_fm_params
    bias   : (1,) float32
    offsets: (F,) int32
    returns: (B,) float32 sigmoid(FM score)
    """
    B, F = x_idx.shape
    rows_pad, V = tab_t.shape
    # Fused multi-hot path assumes a small combined vocab (table + multi-hot in VMEM).
    # TODO(synk): fall back to an XLA-gather path for huge vocab tables (V > 512).
    assert V <= 512, "fused gather path sized for small combined vocabularies"

    # 16 B/row of indices in, transposed so the kernel input is lane-dense.
    gidx = (x_idx.astype(jnp.int32) + offsets[None, :].astype(jnp.int32)).T   # (F, B)

    # Batch tiling: big tiles amortize the ~0.35us per-grid-step overhead; force
    # grid >= 2 when the batch allows it so "parallel" populates both v7x TensorCores.
    tile_quant = 512
    tb = min(max_tile_b, _round_up(B, tile_quant))
    b_pad = _round_up(B, tb)
    if b_pad == tb and b_pad >= 2 * tile_quant:
        tb = b_pad // 2
    grid_n = b_pad // tb

    if b_pad != B:
        gidx = jnp.pad(gidx, ((0, 0), (0, b_pad - B)))   # pad indices, NOT a data slab

    kernel = functools.partial(fm_kernel, embed_dim=embed_dim)
    out = pl.pallas_call(
        kernel,
        out_shape=jax.ShapeDtypeStruct((1, b_pad), jnp.float32),
        grid=(grid_n,),
        in_specs=[
            pl.BlockSpec((F, tb), lambda i: (0, i)),            # indices, lane-dense
            pl.BlockSpec((rows_pad, V), lambda i: (0, 0)),      # VMEM-resident table
            pl.BlockSpec(memory_space=pltpu.MemorySpace.SMEM),  # bias scalar
        ],
        out_specs=pl.BlockSpec((1, tb), lambda i: (0, i)),      # lane-dense scores
        compiler_params=pltpu.CompilerParams(
            dimension_semantics=("parallel",),
            vmem_limit_bytes=48 * 1024 * 1024,                  # <= v7x's 64 MiB physical
        ),
    )(gidx, tab_t, bias.astype(jnp.float32))

    return out[0, :B]   # torch: sigmoid(x.squeeze(1)) -> shape (B,)


if __name__ == "__main__":
    # Model config (matches torchfm __init__ semantics)
    field_dims = (10, 20, 30, 40)   # num_fields = 4
    embed_dim = 16
    batch = 8

    total = sum(field_dims)
    key = jax.random.PRNGKey(0)
    k_emb, k_lin, k_x = jax.random.split(key, 3)

    emb_table = jax.random.normal(k_emb, (total, embed_dim), dtype=jnp.float32) * 0.1
    lin_table = jax.random.normal(k_lin, (total, 1), dtype=jnp.float32) * 0.1
    bias = jnp.zeros((1,), dtype=jnp.float32)

    # Hoisted, one-time table prep (model init).
    tab_t, offsets = prepare_fm_params(emb_table, lin_table, field_dims)

    def make_x(k, b):
        cols = []
        for f, fd in enumerate(field_dims):
            kf = jax.random.fold_in(k, f)
            cols.append(jax.random.randint(kf, (b,), 0, fd, dtype=jnp.int32))
        return jnp.stack(cols, axis=1)   # (b, F) int32

    def ref_forward(x):
        idx = x + offsets[None, :]
        e = emb_table[idx]                                  # (b, F, D)
        s = jnp.sum(e, axis=1)
        ix = 0.5 * jnp.sum(s * s - jnp.sum(e * e, axis=1), axis=1)
        lin = jnp.sum(lin_table[idx][..., 0], axis=1) + bias[0]
        return jax.nn.sigmoid(lin + ix)

    # Small demo batch.
    x = make_x(k_x, batch)
    y = jax.block_until_ready(fm_forward(x, tab_t, bias, offsets, embed_dim=embed_dim))
    assert y.shape == (batch,)
    assert jnp.allclose(y, ref_forward(x), atol=1e-5, rtol=1e-5), (y, ref_forward(x))

    # Padded, multi-tile (grid >= 2) path.
    x2 = make_x(jax.random.fold_in(k_x, 123), 1000)
    y2 = jax.block_until_ready(fm_forward(x2, tab_t, bias, offsets, embed_dim=embed_dim))
    assert y2.shape == (1000,)
    assert jnp.allclose(y2, ref_forward(x2), atol=1e-5, rtol=1e-5)

    print("KERNEL_OK")
</pallas_src>

<mosaic_0001>
module attributes {stable_mosaic.version = 11 : i64} {
  func.func @fm_kernel(%arg0: i32, %arg1: memref<4x512xi32, #tpu.memory_space<vmem>>, %arg2: memref<24x128xf32, #tpu.memory_space<vmem>>, %arg3: memref<1xf32, #tpu.memory_space<smem>>, %arg4: memref<1x512xf32, #tpu.memory_space<vmem>>) attributes {dimension_semantics = [#tpu.dimension_semantics<parallel>], iteration_bounds = array<i64: 1>, scalar_prefetch = 0 : i64, scratch_operands = 0 : i64, tpu.core_type = #tpu.core_type<tc>, window_params = [{transform_indices = @transform_0, window_bounds = array<i64: 4, 512>}, {pipeline_mode = #tpu.pipeline_mode<synchronous>, transform_indices = @transform_1, window_bounds = array<i64: 24, 128>}, {transform_indices = @transform_2, window_bounds = array<i64: 1>}, {transform_indices = @transform_3, window_bounds = array<i64: 1, 512>}]} {
    %0 = tpu.iota {dimensions = array<i32: 0>} : vector<128x512xi32>
    %cst = arith.constant 0.000000e+00 : f32
    %1 = vector.broadcast %cst : f32 to vector<128x512xf32>
    %c0 = arith.constant 0 : index
    %c0_0 = arith.constant 0 : index
    %2 = vector.load %arg1[%c0, %c0_0] : memref<4x512xi32, #tpu.memory_space<vmem>>, vector<1x512xi32>
    %3 = vector.broadcast %2 : vector<1x512xi32> to vector<128x512xi32>
    %4 = arith.cmpi eq, %0, %3 : vector<128x512xi32>
    %5 = arith.extui %4 : vector<128x512xi1> to vector<128x512xi32>
    %6 = arith.sitofp %5 : vector<128x512xi32> to vector<128x512xf32>
    %7 = arith.addf %1, %6 : vector<128x512xf32>
    %c1 = arith.constant 1 : index
    %c0_1 = arith.constant 0 : index
    %8 = vector.load %arg1[%c1, %c0_1] : memref<4x512xi32, #tpu.memory_space<vmem>>, vector<1x512xi32>
    %9 = vector.broadcast %8 : vector<1x512xi32> to vector<128x512xi32>
    %10 = arith.cmpi eq, %0, %9 : vector<128x512xi32>
    %11 = arith.extui %10 : vector<128x512xi1> to vector<128x512xi32>
    %12 = arith.sitofp %11 : vector<128x512xi32> to vector<128x512xf32>
    %13 = arith.addf %7, %12 : vector<128x512xf32>
    %c2 = arith.constant 2 : index
    %c0_2 = arith.constant 0 : index
    %14 = vector.load %arg1[%c2, %c0_2] : memref<4x512xi32, #tpu.memory_space<vmem>>, vector<1x512xi32>
    %15 = vector.broadcast %14 : vector<1x512xi32> to vector<128x512xi32>
    %16 = arith.cmpi eq, %0, %15 : vector<128x512xi32>
    %17 = arith.extui %16 : vector<128x512xi1> to vector<128x512xi32>
    %18 = arith.sitofp %17 : vector<128x512xi32> to vector<128x512xf32>
    %19 = arith.addf %13, %18 : vector<128x512xf32>
    %c3 = arith.constant 3 : index
    %c0_3 = arith.constant 0 : index
    %20 = vector.load %arg1[%c3, %c0_3] : memref<4x512xi32, #tpu.memory_space<vmem>>, vector<1x512xi32>
    %21 = vector.broadcast %20 : vector<1x512xi32> to vector<128x512xi32>
    %22 = arith.cmpi eq, %0, %21 : vector<128x512xi32>
    %23 = arith.extui %22 : vector<128x512xi1> to vector<128x512xi32>
    %24 = arith.sitofp %23 : vector<128x512xi32> to vector<128x512xf32>
    %25 = arith.addf %19, %24 : vector<128x512xf32>
    %c0_4 = arith.constant 0 : index
    %c0_5 = arith.constant 0 : index
    %26 = vector.load %arg2[%c0_4, %c0_5] : memref<24x128xf32, #tpu.memory_space<vmem>>, vector<24x128xf32>
    %cst_6 = arith.constant dense<0.000000e+00> : vector<24x512xf32>
    %27 = tpu.matmul %26, %25, %cst_6 {dimension_numbers = #tpu.dot_dimension_numbers<[1], [0], [0], [1], [0, 0, 1, 1], [], []>} : vector<24x128xf32>, vector<128x512xf32>, vector<24x512xf32> -> vector<24x512xf32>
    %28 = vector.extract_strided_slice %27 {offsets = [0, 0], sizes = [16, 512], strides = [1, 1]} : vector<24x512xf32> to vector<16x512xf32>
    %29 = vector.extract_strided_slice %27 {offsets = [16, 0], sizes = [1, 512], strides = [1, 1]} : vector<24x512xf32> to vector<1x512xf32>
    %30 = vector.extract_strided_slice %27 {offsets = [17, 0], sizes = [1, 512], strides = [1, 1]} : vector<24x512xf32> to vector<1x512xf32>
    %31 = arith.mulf %28, %28 : vector<16x512xf32>
    %cst_7 = arith.constant dense<0.000000e+00> : vector<512xf32>
    %32 = vector.multi_reduction <add>, %31, %cst_7 [0] : vector<16x512xf32> to vector<512xf32>
    %33 = vector.shape_cast %32 : vector<512xf32> to vector<1x512xf32>
    %34 = arith.subf %33, %29 : vector<1x512xf32>
    %cst_8 = arith.constant 5.000000e-01 : f32
    %35 = vector.broadcast %cst_8 : f32 to vector<1x512xf32>
    %36 = arith.mulf %35, %34 : vector<1x512xf32>
    %37 = arith.addf %30, %36 : vector<1x512xf32>
    %c0_9 = arith.constant 0 : index
    %38 = memref.load %arg3[%c0_9] : memref<1xf32, #tpu.memory_space<smem>>
    %39 = vector.broadcast %38 : f32 to vector<1x512xf32>
    %40 = arith.addf %37, %39 : vector<1x512xf32>
    %41 = arith.negf %40 : vector<1x512xf32>
    %42 = math.exp %41 : vector<1x512xf32>
    %cst_10 = arith.constant 1.000000e+00 : f32
    %43 = vector.broadcast %cst_10 : f32 to vector<1x512xf32>
    %44 = arith.addf %43, %42 : vector<1x512xf32>
    %45 = arith.divf %43, %44 : vector<1x512xf32>
    %c0_11 = arith.constant 0 : index
    %c0_12 = arith.constant 0 : index
    %46 = vector.load %arg4[%c0_11, %c0_12] : memref<1x512xf32, #tpu.memory_space<vmem>>, vector<1x512xf32>
    tpu.vector_store %arg4[%c0_11, %c0_12], %45 {strides = array<i32>} : memref<1x512xf32, #tpu.memory_space<vmem>>, vector<1x512xf32>,
    return
  }
  func.func @transform_0(%arg0: i32) -> (i32, i32) {
    %c0_i32 = arith.constant 0 : i32
    %c0_i32_0 = arith.constant 0 : i32
    return %c0_i32, %arg0 : i32, i32
  }
  func.func @transform_1(%arg0: i32) -> (i32, i32) {
    %c0_i32 = arith.constant 0 : i32
    %c0_i32_0 = arith.constant 0 : i32
    %c0_i32_1 = arith.constant 0 : i32
    return %c0_i32, %c0_i32_0 : i32, i32
  }
  func.func @transform_2(%arg0: i32) -> i32 {
    %c0_i32 = arith.constant 0 : i32
    %c0_i32_0 = arith.constant 0 : i32
    return %c0_i32 : i32
  }
  func.func @transform_3(%arg0: i32) -> (i32, i32) {
    %c0_i32 = arith.constant 0 : i32
    %c0_i32_0 = arith.constant 0 : i32
    return %c0_i32, %arg0 : i32, i32
  }
}

</mosaic_0001>

<llo_original>
// kernel: tpu_custom_call.1
$region0: #{tpu_custom_call.1}
  #allocation0 [shape = 'u32[]', space=smem, size = 0x4, offset = 0x4, fixed_abs, tag = 'smem constant byte address 0x4 - core index']
  #allocation1 [shape = 'u32[144,128]{1,0:T(1,128)}', space=vmem, size = 0x12000, scoped, tag = 'internal scratch']
  #allocation2 [shape = 'f32[1]{0:T(128)S(6)}', space=smem, size = 0x200, scoped, tag = 'scoped memory for tpu_custom_call.1']
  %s0 = inlined_call_operand.hbm [shape: s32[4,512], index: 0, kind: input, shape index: {}]
  %s1 = inlined_call_operand.hbm [shape: f32[24,128], index: 1, kind: input, shape index: {}]
  %s2 = inlined_call_operand.<no memory space> [shape: f32[1], index: 2, kind: input, shape index: {}]
  %s3 = inlined_call_operand.hbm [shape: f32[1,512], index: 3, kind: output, shape index: {}]
  %s4 = sld [smem:[#allocation0]]
  $region30: #{tpu_custom_call.1} parent=0
    _
  %s6 = ssub.s32 1, %s4
  %s7 = scalar_select 0, %s6, %s4
  %8 = sst [smem:[#allocation2]] %s2
  $region1: #{tpu_custom_call.1} parent=0
    #allocation3 [shape = 'u8[8192]{0}', space=vmem, size = 0x2000, scoped, tag = 'input window, operand 0, single buffered']
    #allocation4 [shape = 's32[1]{0}', space=sflag, size = 0x4, scoped, tag = 'scoped memory for tpu_custom_call.1']
    #allocation5 [shape = 's32[1]{0}', space=sflag, size = 0x4, scoped, tag = 'scoped memory for tpu_custom_call.1']
    #allocation6 [shape = 'u8[12288]{0}', space=vmem, size = 0x3000, scoped, tag = 'input window, operand 1, single buffered']
    #allocation7 [shape = 's32[1]{0}', space=sflag, size = 0x4, scoped, tag = 'scoped memory for tpu_custom_call.1']
    #allocation8 [shape = 'u8[2048]{0}', space=vmem, size = 0x800, scoped, tag = 'output window, operand 0, single buffered']
    %9 = vsyncpa [#allocation4], 0
    %10 = vsyncpa [#allocation7], 0
    %11 = vsyncpa [#allocation5], 0
    // Predicated region
    $region2: #{tpu_custom_call.1} parent=1 // pred_check
      _
    $region3: #{tpu_custom_call.1} parent=1 // pred_check_branch
      %13 = sbr.rel (0) target = $region5
    $region4: #{tpu_custom_call.1} parent=1 // pred_region
      %s15 = ssub.s32 256, 256
      %16 = vsyncadd [#allocation4], %s15
      %s18 = sshll.u32 [#allocation3], 4
      %s19 = int_to_ptr.vmem [resolvable:$true] %s18
      %21 = dma.hbm_to_vmem [thread:$0]  %s0, 256, %s19, [#allocation4]
    $region5: #{tpu_custom_call.1} parent=1 // pred_fallthru
      _
    // Predicated region
    $region6: #{tpu_custom_call.1} parent=1 // pred_check
      _
    $region7: #{tpu_custom_call.1} parent=1 // pred_check_branch
      %23 = sbr.rel (0) target = $region9
    $region8: #{tpu_custom_call.1} parent=1 // pred_region
      %s25 = ssub.s32 384, 384
      %26 = vsyncadd [#allocation7], %s25
      %s27 = sshll.u32 [#allocation6], 4
      %s28 = int_to_ptr.vmem [resolvable:$true] %s27
      %33 = dma.hbm_to_vmem [thread:$0]  %s1, 384, %s28, [#allocation7], 128, 128, 8
    $region9: #{tpu_custom_call.1} parent=1 // pred_fallthru
      _
    // Predicated region
    $region10: #{tpu_custom_call.1} parent=1 // pred_check
      _
    $region11: #{tpu_custom_call.1} parent=1 // pred_check_branch
      %35 = sbr.rel (0) target = $region13
    $region12: #{tpu_custom_call.1} parent=1 // pred_region
      _
    $region13: #{tpu_custom_call.1} parent=1 // pred_fallthru
      _
    // Predicated region
    $region14: #{tpu_custom_call.1} parent=1 // pred_check
      _
    $region15: #{tpu_custom_call.1} parent=1 // pred_check_branch
      %37 = sbr.rel (0) target = $region17
    $region16: #{tpu_custom_call.1} parent=1 // pred_region
      %38 = dma.done [#allocation4], 256
    $region17: #{tpu_custom_call.1} parent=1 // pred_fallthru
      _
    // Predicated region
    $region18: #{tpu_custom_call.1} parent=1 // pred_check
      _
    $region19: #{tpu_custom_call.1} parent=1 // pred_check_branch
      %40 = sbr.rel (0) target = $region21
    $region20: #{tpu_custom_call.1} parent=1 // pred_region
      %41 = dma.done [#allocation7], 384
    $region21: #{tpu_custom_call.1} parent=1 // pred_fallthru
      _
    %v42 = vlaneseq
    %v43 = vshrl.u32 %v42, 7
    %v44 = vadd.s32 %v43, 8
    %v45 = vadd.s32 %v43, 16
    %v46 = vadd.s32 %v43, 24
    %v47 = vadd.s32 %v43, 32
    %v48 = vadd.s32 %v43, 40
    %v49 = vadd.s32 %v43, 48
    %v50 = vadd.s32 %v43, 56
    %v51 = vadd.s32 %v43, 64
    %v52 = vadd.s32 %v43, 72
    %v53 = vadd.s32 %v43, 80
    %v54 = vadd.s32 %v43, 88
    %v55 = vadd.s32 %v43, 96
    %v56 = vadd.s32 %v43, 104
    %v57 = vadd.s32 %v43, 112
    %v58 = vadd.s32 %v43, 120
    %v59 = vld [vmem:[#allocation3] ss:$4 sm:$0xf]
    %v60 = vlaneseq
    %v61 = vshrl.u32 %v60, 7
    %v62 = vsub.s32 0, %v61
    %v63 = vrot.slane %v59, %v62
    %v64 = vlaneseq
    %v65 = vshrl.u32 %v64, 7
    %v66 = vsub.s32 1, %v65
    %v67 = vrot.slane %v59, %v66
    %v68 = vlaneseq
    %v69 = vshrl.u32 %v68, 7
    %v70 = vsub.s32 2, %v69
    %v71 = vrot.slane %v59, %v70
    %v72 = vlaneseq
    %v73 = vshrl.u32 %v72, 7
    %v74 = vsub.s32 3, %v73
    %v75 = vrot.slane %v59, %v74
    %vm76 = vcmp.eq.s32.totalorder %v43, %v63
    %vm77 = vcmp.eq.s32.totalorder %v43, %v67
    %vm78 = vcmp.eq.s32.totalorder %v43, %v71
    %vm79 = vcmp.eq.s32.totalorder %v43, %v75
    %vm80 = vcmp.eq.s32.totalorder %v44, %v63
    %vm81 = vcmp.eq.s32.totalorder %v44, %v67
    %vm82 = vcmp.eq.s32.totalorder %v44, %v71
    %vm83 = vcmp.eq.s32.totalorder %v44, %v75
    %vm84 = vcmp.eq.s32.totalorder %v45, %v63
    %vm85 = vcmp.eq.s32.totalorder %v45, %v67
    %vm86 = vcmp.eq.s32.totalorder %v45, %v71
    %vm87 = vcmp.eq.s32.totalorder %v45, %v75
    %vm88 = vcmp.eq.s32.totalorder %v46, %v63
    %vm89 = vcmp.eq.s32.totalorder %v46, %v67
    %vm90 = vcmp.eq.s32.totalorder %v46, %v71
    %vm91 = vcmp.eq.s32.totalorder %v46, %v75
    %vm92 = vcmp.eq.s32.totalorder %v47, %v63
    %vm93 = vcmp.eq.s32.totalorder %v47, %v67
    %vm94 = vcmp.eq.s32.totalorder %v47, %v71
    %vm95 = vcmp.eq.s32.totalorder %v47, %v75
    %vm96 = vcmp.eq.s32.totalorder %v48, %v63
    %vm97 = vcmp.eq.s32.totalorder %v48, %v67
    %vm98 = vcmp.eq.s32.totalorder %v48, %v71
    %vm99 = vcmp.eq.s32.totalorder %v48, %v75
    %vm100 = vcmp.eq.s32.totalorder %v49, %v63
    %vm101 = vcmp.eq.s32.totalorder %v49, %v67
    %vm102 = vcmp.eq.s32.totalorder %v49, %v71
    %vm103 = vcmp.eq.s32.totalorder %v49, %v75
    %vm104 = vcmp.eq.s32.totalorder %v50, %v63
    %vm105 = vcmp.eq.s32.totalorder %v50, %v67
    %vm106 = vcmp.eq.s32.totalorder %v50, %v71
    %vm107 = vcmp.eq.s32.totalorder %v50, %v75
    %vm108 = vcmp.eq.s32.totalorder %v51, %v63
    %vm109 = vcmp.eq.s32.totalorder %v51, %v67
    %vm110 = vcmp.eq.s32.totalorder %v51, %v71
    %vm111 = vcmp.eq.s32.totalorder %v51, %v75
    %vm112 = vcmp.eq.s32.totalorder %v52, %v63
    %vm113 = vcmp.eq.s32.totalorder %v52, %v67
    %vm114 = vcmp.eq.s32.totalorder %v52, %v71
    %vm115 = vcmp.eq.s32.totalorder %v52, %v75
    %vm116 = vcmp.eq.s32.totalorder %v53, %v63
    %vm117 = vcmp.eq.s32.totalorder %v53, %v67
    %vm118 = vcmp.eq.s32.totalorder %v53, %v71
    %vm119 = vcmp.eq.s32.totalorder %v53, %v75
    %vm120 = vcmp.eq.s32.totalorder %v54, %v63
    %vm121 = vcmp.eq.s32.totalorder %v54, %v67
    %vm122 = vcmp.eq.s32.totalorder %v54, %v71
    %vm123 = vcmp.eq.s32.totalorder %v54, %v75
    %vm124 = vcmp.eq.s32.totalorder %v55, %v63
    %vm125 = vcmp.eq.s32.totalorder %v55, %v67
    %vm126 = vcmp.eq.s32.totalorder %v55, %v71
    %vm127 = vcmp.eq.s32.totalorder %v55, %v75
    %vm128 = vcmp.eq.s32.totalorder %v56, %v63
    %vm129 = vcmp.eq.s32.totalorder %v56, %v67
    %vm130 = vcmp.eq.s32.totalorder %v56, %v71
    %vm131 = vcmp.eq.s32.totalorder %v56, %v75
    %vm132 = vcmp.eq.s32.totalorder %v57, %v63
    %vm133 = vcmp.eq.s32.totalorder %v57, %v67
    %vm134 = vcmp.eq.s32.totalorder %v57, %v71
    %vm135 = vcmp.eq.s32.totalorder %v57, %v75
    %vm136 = vcmp.eq.s32.totalorder %v58, %v63
    %vm137 = vcmp.eq.s32.totalorder %v58, %v67
    %vm138 = vcmp.eq.s32.totalorder %v58, %v71
    %vm139 = vcmp.eq.s32.totalorder %v58, %v75
    %v140 = vsel %vm76, 1, 0
    %v141 = vsel %vm77, 1, 0
    %v142 = vsel %vm78, 1, 0
    %v143 = vsel %vm79, 1, 0
    %v144 = vsel %vm80, 1, 0
    %v145 = vsel %vm81, 1, 0
    %v146 = vsel %vm82, 1, 0
    %v147 = vsel %vm83, 1, 0
    %v148 = vsel %vm84, 1, 0
    %v149 = vsel %vm85, 1, 0
    %v150 = vsel %vm86, 1, 0
    %v151 = vsel %vm87, 1, 0
    %v152 = vsel %vm88, 1, 0
    %v153 = vsel %vm89, 1, 0
    %v154 = vsel %vm90, 1, 0
    %v155 = vsel %vm91, 1, 0
    %v156 = vsel %vm92, 1, 0
    %v157 = vsel %vm93, 1, 0
    %v158 = vsel %vm94, 1, 0
    %v159 = vsel %vm95, 1, 0
    %v160 = vsel %vm96, 1, 0
    %v161 = vsel %vm97, 1, 0
    %v162 = vsel %vm98, 1, 0
    %v163 = vsel %vm99, 1, 0
    %v164 = vsel %vm100, 1, 0
    %v165 = vsel %vm101, 1, 0
    %v166 = vsel %vm102, 1, 0
    %v167 = vsel %vm103, 1, 0
    %v168 = vsel %vm104, 1, 0
    %v169 = vsel %vm105, 1, 0
    %v170 = vsel %vm106, 1, 0
    %v171 = vsel %vm107, 1, 0
    %v172 = vsel %vm108, 1, 0
    %v173 = vsel %vm109, 1, 0
    %v174 = vsel %vm110, 1, 0
    %v175 = vsel %vm111, 1, 0
    %v176 = vsel %vm112, 1, 0
    %v177 = vsel %vm113, 1, 0
    %v178 = vsel %vm114, 1, 0
    %v179 = vsel %vm115, 1, 0
    %v180 = vsel %vm116, 1, 0
    %v181 = vsel %vm117, 1, 0
    %v182 = vsel %vm118, 1, 0
    %v183 = vsel %vm119, 1, 0
    %v184 = vsel %vm120, 1, 0
    %v185 = vsel %vm121, 1, 0
    %v186 = vsel %vm122, 1, 0
    %v187 = vsel %vm123, 1, 0
    %v188 = vsel %vm124, 1, 0
    %v189 = vsel %vm125, 1, 0
    %v190 = vsel %vm126, 1, 0
    %v191 = vsel %vm127, 1, 0
    %v192 = vsel %vm128, 1, 0
    %v193 = vsel %vm129, 1, 0
    %v194 = vsel %vm130, 1, 0
    %v195 = vsel %vm131, 1, 0
    %v196 = vsel %vm132, 1, 0
    %v197 = vsel %vm133, 1, 0
    %v198 = vsel %vm134, 1, 0
    %v199 = vsel %vm135, 1, 0
    %v200 = vsel %vm136, 1, 0
    %v201 = vsel %vm137, 1, 0
    %v202 = vsel %vm138, 1, 0
    %v203 = vsel %vm139, 1, 0
    %v204 = vcvt.s32.f32 %v140
    %v205 = vcvt.s32.f32 %v141
    %v206 = vcvt.s32.f32 %v142
    %v207 = vcvt.s32.f32 %v143
    %v208 = vcvt.s32.f32 %v144
    %v209 = vcvt.s32.f32 %v145
    %v210 = vcvt.s32.f32 %v146
    %v211 = vcvt.s32.f32 %v147
    %v212 = vcvt.s32.f32 %v148
    %v213 = vcvt.s32.f32 %v149
    %v214 = vcvt.s32.f32 %v150
    %v215 = vcvt.s32.f32 %v151
    %v216 = vcvt.s32.f32 %v152
    %v217 = vcvt.s32.f32 %v153
    %v218 = vcvt.s32.f32 %v154
    %v219 = vcvt.s32.f32 %v155
    %v220 = vcvt.s32.f32 %v156
    %v221 = vcvt.s32.f32 %v157
    %v222 = vcvt.s32.f32 %v158
    %v223 = vcvt.s32.f32 %v159
    %v224 = vcvt.s32.f32 %v160
    %v225 = vcvt.s32.f32 %v161
    %v226 = vcvt.s32.f32 %v162
    %v227 = vcvt.s32.f32 %v163
    %v228 = vcvt.s32.f32 %v164
    %v229 = vcvt.s32.f32 %v165
    %v230 = vcvt.s32.f32 %v166
    %v231 = vcvt.s32.f32 %v167
    %v232 = vcvt.s32.f32 %v168
    %v233 = vcvt.s32.f32 %v169
    %v234 = vcvt.s32.f32 %v170
    %v235 = vcvt.s32.f32 %v171
    %v236 = vcvt.s32.f32 %v172
    %v237 = vcvt.s32.f32 %v173
    %v238 = vcvt.s32.f32 %v174
    %v239 = vcvt.s32.f32 %v175
    %v240 = vcvt.s32.f32 %v176
    %v241 = vcvt.s32.f32 %v177
    %v242 = vcvt.s32.f32 %v178
    %v243 = vcvt.s32.f32 %v179
    %v244 = vcvt.s32.f32 %v180
    %v245 = vcvt.s32.f32 %v181
    %v246 = vcvt.s32.f32 %v182
    %v247 = vcvt.s32.f32 %v183
    %v248 = vcvt.s32.f32 %v184
    %v249 = vcvt.s32.f32 %v185
    %v250 = vcvt.s32.f32 %v186
    %v251 = vcvt.s32.f32 %v187
    %v252 = vcvt.s32.f32 %v188
    %v253 = vcvt.s32.f32 %v189
    %v254 = vcvt.s32.f32 %v190
    %v255 = vcvt.s32.f32 %v191
    %v256 = vcvt.s32.f32 %v192
    %v257 = vcvt.s32.f32 %v193
    %v258 = vcvt.s32.f32 %v194
    %v259 = vcvt.s32.f32 %v195
    %v260 = vcvt.s32.f32 %v196
    %v261 = vcvt.s32.f32 %v197
    %v262 = vcvt.s32.f32 %v198
    %v263 = vcvt.s32.f32 %v199
    %v264 = vcvt.s32.f32 %v200
    %v265 = vcvt.s32.f32 %v201
    %v266 = vcvt.s32.f32 %v202
    %v267 = vcvt.s32.f32 %v203
    %v268 = vadd.f32 %v204, 0.0
    %v269 = vadd.f32 %v205, 0.0
    %v270 = vadd.f32 %v206, 0.0
    %v271 = vadd.f32 %v207, 0.0
    %v272 = vadd.f32 %v208, 0.0
    %v273 = vadd.f32 %v209, 0.0
    %v274 = vadd.f32 %v210, 0.0
    %v275 = vadd.f32 %v211, 0.0
    %v276 = vadd.f32 %v212, 0.0
    %v277 = vadd.f32 %v213, 0.0
    %v278 = vadd.f32 %v214, 0.0
    %v279 = vadd.f32 %v215, 0.0
    %v280 = vadd.f32 %v216, 0.0
    %v281 = vadd.f32 %v217, 0.0
    %v282 = vadd.f32 %v218, 0.0
    %v283 = vadd.f32 %v219, 0.0
    %v284 = vadd.f32 %v220, 0.0
    %v285 = vadd.f32 %v221, 0.0
    %v286 = vadd.f32 %v222, 0.0
    %v287 = vadd.f32 %v223, 0.0
    %v288 = vadd.f32 %v224, 0.0
    %v289 = vadd.f32 %v225, 0.0
    %v290 = vadd.f32 %v226, 0.0
    %v291 = vadd.f32 %v227, 0.0
    %v292 = vadd.f32 %v228, 0.0
    %v293 = vadd.f32 %v229, 0.0
    %v294 = vadd.f32 %v230, 0.0
    %v295 = vadd.f32 %v231, 0.0
    %v296 = vadd.f32 %v232, 0.0
    %v297 = vadd.f32 %v233, 0.0
    %v298 = vadd.f32 %v234, 0.0
    %v299 = vadd.f32 %v235, 0.0
    %v300 = vadd.f32 %v236, 0.0
    %v301 = vadd.f32 %v237, 0.0
    %v302 = vadd.f32 %v238, 0.0
    %v303 = vadd.f32 %v239, 0.0
    %v304 = vadd.f32 %v240, 0.0
    %v305 = vadd.f32 %v241, 0.0
    %v306 = vadd.f32 %v242, 0.0
    %v307 = vadd.f32 %v243, 0.0
    %v308 = vadd.f32 %v244, 0.0
    %v309 = vadd.f32 %v245, 0.0
    %v310 = vadd.f32 %v246, 0.0
    %v311 = vadd.f32 %v247, 0.0
    %v312 = vadd.f32 %v248, 0.0
    %v313 = vadd.f32 %v249, 0.0
    %v314 = vadd.f32 %v250, 0.0
    %v315 = vadd.f32 %v251, 0.0
    %v316 = vadd.f32 %v252, 0.0
    %v317 = vadd.f32 %v253, 0.0
    %v318 = vadd.f32 %v254, 0.0
    %v319 = vadd.f32 %v255, 0.0
    %v320 = vadd.f32 %v256, 0.0
    %v321 = vadd.f32 %v257, 0.0
    %v322 = vadd.f32 %v258, 0.0
    %v323 = vadd.f32 %v259, 0.0
    %v324 = vadd.f32 %v260, 0.0
    %v325 = vadd.f32 %v261, 0.0
    %v326 = vadd.f32 %v262, 0.0
    %v327 = vadd.f32 %v263, 0.0
    %v328 = vadd.f32 %v264, 0.0
    %v329 = vadd.f32 %v265, 0.0
    %v330 = vadd.f32 %v266, 0.0
    %v331 = vadd.f32 %v267, 0.0
    %s332 = scalar_lea.vmem [#allocation3], 1
    %v333 = vld [vmem:[%s332] ss:$4 sm:$0xf]
    %v334 = vlaneseq
    %v335 = vshrl.u32 %v334, 7
    %v336 = vsub.s32 0, %v335
    %v337 = vrot.slane %v333, %v336
    %v338 = vlaneseq
    %v339 = vshrl.u32 %v338, 7
    %v340 = vsub.s32 1, %v339
    %v341 = vrot.slane %v333, %v340
    %v342 = vlaneseq
    %v343 = vshrl.u32 %v342, 7
    %v344 = vsub.s32 2, %v343
    %v345 = vrot.slane %v333, %v344
    %v346 = vlaneseq
    %v347 = vshrl.u32 %v346, 7
    %v348 = vsub.s32 3, %v347
    %v349 = vrot.slane %v333, %v348
    %vm350 = vcmp.eq.s32.totalorder %v43, %v337
    %vm351 = vcmp.eq.s32.totalorder %v43, %v341
    %vm352 = vcmp.eq.s32.totalorder %v43, %v345
    %vm353 = vcmp.eq.s32.totalorder %v43, %v349
    %vm354 = vcmp.eq.s32.totalorder %v44, %v337
    %vm355 = vcmp.eq.s32.totalorder %v44, %v341
    %vm356 = vcmp.eq.s32.totalorder %v44, %v345
    %vm357 = vcmp.eq.s32.totalorder %v44, %v349
    %vm358 = vcmp.eq.s32.totalorder %v45, %v337
    %vm359 = vcmp.eq.s32.totalorder %v45, %v341
    %vm360 = vcmp.eq.s32.totalorder %v45, %v345
    %vm361 = vcmp.eq.s32.totalorder %v45, %v349
    %vm362 = vcmp.eq.s32.totalorder %v46, %v337
    %vm363 = vcmp.eq.s32.totalorder %v46, %v341
    %vm364 = vcmp.eq.s32.totalorder %v46, %v345
    %vm365 = vcmp.eq.s32.totalorder %v46, %v349
    %vm366 = vcmp.eq.s32.totalorder %v47, %v337
    %vm367 = vcmp.eq.s32.totalorder %v47, %v341
    %vm368 = vcmp.eq.s32.totalorder %v47, %v345
    %vm369 = vcmp.eq.s32.totalorder %v47, %v349
    %vm370 = vcmp.eq.s32.totalorder %v48, %v337
    %vm371 = vcmp.eq.s32.totalorder %v48, %v341
    %vm372 = vcmp.eq.s32.totalorder %v48, %v345
    %vm373 = vcmp.eq.s32.totalorder %v48, %v349
    %vm374 = vcmp.eq.s32.totalorder %v49, %v337
    %vm375 = vcmp.eq.s32.totalorder %v49, %v341
    %vm376 = vcmp.eq.s32.totalorder %v49, %v345
    %vm377 = vcmp.eq.s32.totalorder %v49, %v349
    %vm378 = vcmp.eq.s32.totalorder %v50, %v337
    %vm379 = vcmp.eq.s32.totalorder %v50, %v341
    %vm380 = vcmp.eq.s32.totalorder %v50, %v345
    %vm381 = vcmp.eq.s32.totalorder %v50, %v349
    %vm382 = vcmp.eq.s32.totalorder %v51, %v337
    %vm383 = vcmp.eq.s32.totalorder %v51, %v341
    %vm384 = vcmp.eq.s32.totalorder %v51, %v345
    %vm385 = vcmp.eq.s32.totalorder %v51, %v349
    %vm386 = vcmp.eq.s32.totalorder %v52, %v337
    %vm387 = vcmp.eq.s32.totalorder %v52, %v341
    %vm388 = vcmp.eq.s32.totalorder %v52, %v345
    %vm389 = vcmp.eq.s32.totalorder %v52, %v349
    %vm390 = vcmp.eq.s32.totalorder %v53, %v337
    %vm391 = vcmp.eq.s32.totalorder %v53, %v341
    %vm392 = vcmp.eq.s32.totalorder %v53, %v345
    %vm393 = vcmp.eq.s32.totalorder %v53, %v349
    %vm394 = vcmp.eq.s32.totalorder %v54, %v337
    %vm395 = vcmp.eq.s32.totalorder %v54, %v341
    %vm396 = vcmp.eq.s32.totalorder %v54, %v345
    %vm397 = vcmp.eq.s32.totalorder %v54, %v349
    %vm398 = vcmp.eq.s32.totalorder %v55, %v337
    %vm399 = vcmp.eq.s32.totalorder %v55, %v341
    %vm400 = vcmp.eq.s32.totalorder %v55, %v345
    %vm401 = vcmp.eq.s32.totalorder %v55, %v349
    %vm402 = vcmp.eq.s32.totalorder %v56, %v337
    %vm403 = vcmp.eq.s32.totalorder %v56, %v341
    %vm404 = vcmp.eq.s32.totalorder %v56, %v345
    %vm405 = vcmp.eq.s32.totalorder %v56, %v349
    %vm406 = vcmp.eq.s32.totalorder %v57, %v337
    %vm407 = vcmp.eq.s32.totalorder %v57, %v341
    %vm408 = vcmp.eq.s32.totalorder %v57, %v345
    %vm409 = vcmp.eq.s32.totalorder %v57, %v349
    %vm410 = vcmp.eq.s32.totalorder %v58, %v337
    %vm411 = vcmp.eq.s32.totalorder %v58, %v341
    %vm412 = vcmp.eq.s32.totalorder %v58, %v345
    %vm413 = vcmp.eq.s32.totalorder %v58, %v349
    %v414 = vsel %vm350, 1, 0
    %v415 = vsel %vm351, 1, 0
    %v416 = vsel %vm352, 1, 0
    %v417 = vsel %vm353, 1, 0
    %v418 = vsel %vm354, 1, 0
    %v419 = vsel %vm355, 1, 0
    %v420 = vsel %vm356, 1, 0
    %v421 = vsel %vm357, 1, 0
    %v422 = vsel %vm358, 1, 0
    %v423 = vsel %vm359, 1, 0
    %v424 = vsel %vm360, 1, 0
    %v425 = vsel %vm361, 1, 0
    %v426 = vsel %vm362, 1, 0
    %v427 = vsel %vm363, 1, 0
    %v428 = vsel %vm364, 1, 0
    %v429 = vsel %vm365, 1, 0
    %v430 = vsel %vm366, 1, 0
    %v431 = vsel %vm367, 1, 0
    %v432 = vsel %vm368, 1, 0
    %v433 = vsel %vm369, 1, 0
    %v434 = vsel %vm370, 1, 0
    %v435 = vsel %vm371, 1, 0
    %v436 = vsel %vm372, 1, 0
    %v437 = vsel %vm373, 1, 0
    %v438 = vsel %vm374, 1, 0
    %v439 = vsel %vm375, 1, 0
    %v440 = vsel %vm376, 1, 0
    %v441 = vsel %vm377, 1, 0
    %v442 = vsel %vm378, 1, 0
    %v443 = vsel %vm379, 1, 0
    %v444 = vsel %vm380, 1, 0
    %v445 = vsel %vm381, 1, 0
    %v446 = vsel %vm382, 1, 0
    %v447 = vsel %vm383, 1, 0
    %v448 = vsel %vm384, 1, 0
    %v449 = vsel %vm385, 1, 0
    %v450 = vsel %vm386, 1, 0
    %v451 = vsel %vm387, 1, 0
    %v452 = vsel %vm388, 1, 0
    %v453 = vsel %vm389, 1, 0
    %v454 = vsel %vm390, 1, 0
    %v455 = vsel %vm391, 1, 0
    %v456 = vsel %vm392, 1, 0
    %v457 = vsel %vm393, 1, 0
    %v458 = vsel %vm394, 1, 0
    %v459 = vsel %vm395, 1, 0
    %v460 = vsel %vm396, 1, 0
    %v461 = vsel %vm397, 1, 0
    %v462 = vsel %vm398, 1, 0
    %v463 = vsel %vm399, 1, 0
    %v464 = vsel %vm400, 1, 0
    %v465 = vsel %vm401, 1, 0
    %v466 = vsel %vm402, 1, 0
    %v467 = vsel %vm403, 1, 0
    %v468 = vsel %vm404, 1, 0
    %v469 = vsel %vm405, 1, 0
    %v470 = vsel %vm406, 1, 0
    %v471 = vsel %vm407, 1, 0
    %v472 = vsel %vm408, 1, 0
    %v473 = vsel %vm409, 1, 0
    %v474 = vsel %vm410, 1, 0
    %v475 = vsel %vm411, 1, 0
    %v476 = vsel %vm412, 1, 0
    %v477 = vsel %vm413, 1, 0
    %v478 = vcvt.s32.f32 %v414
    %v479 = vcvt.s32.f32 %v415
    %v480 = vcvt.s32.f32 %v416
    %v481 = vcvt.s32.f32 %v417
    %v482 = vcvt.s32.f32 %v418
    %v483 = vcvt.s32.f32 %v419
    %v484 = vcvt.s32.f32 %v420
    %v485 = vcvt.s32.f32 %v421
    %v486 = vcvt.s32.f32 %v422
    %v487 = vcvt.s32.f32 %v423
    %v488 = vcvt.s32.f32 %v424
    %v489 = vcvt.s32.f32 %v425
    %v490 = vcvt.s32.f32 %v426
    %v491 = vcvt.s32.f32 %v427
    %v492 = vcvt.s32.f32 %v428
    %v493 = vcvt.s32.f32 %v429
    %v494 = vcvt.s32.f32 %v430
    %v495 = vcvt.s32.f32 %v431
    %v496 = vcvt.s32.f32 %v432
    %v497 = vcvt.s32.f32 %v433
    %v498 = vcvt.s32.f32 %v434
    %v499 = vcvt.s32.f32 %v435
    %v500 = vcvt.s32.f32 %v436
    %v501 = vcvt.s32.f32 %v437
    %v502 = vcvt.s32.f32 %v438
    %v503 = vcvt.s32.f32 %v439
    %v504 = vcvt.s32.f32 %v440
    %v505 = vcvt.s32.f32 %v441
    %v506 = vcvt.s32.f32 %v442
    %v507 = vcvt.s32.f32 %v443
    %v508 = vcvt.s32.f32 %v444
    %v509 = vcvt.s32.f32 %v445
    %v510 = vcvt.s32.f32 %v446
    %v511 = vcvt.s32.f32 %v447
    %v512 = vcvt.s32.f32 %v448
    %v513 = vcvt.s32.f32 %v449
    %v514 = vcvt.s32.f32 %v450
    %v515 = vcvt.s32.f32 %v451
    %v516 = vcvt.s32.f32 %v452
    %v517 = vcvt.s32.f32 %v453
    %v518 = vcvt.s32.f32 %v454
    %v519 = vcvt.s32.f32 %v455
    %v520 = vcvt.s32.f32 %v456
    %v521 = vcvt.s32.f32 %v457
    %v522 = vcvt.s32.f32 %v458
    %v523 = vcvt.s32.f32 %v459
    %v524 = vcvt.s32.f32 %v460
    %v525 = vcvt.s32.f32 %v461
    %v526 = vcvt.s32.f32 %v462
    %v527 = vcvt.s32.f32 %v463
    %v528 = vcvt.s32.f32 %v464
    %v529 = vcvt.s32.f32 %v465
    %v530 = vcvt.s32.f32 %v466
    %v531 = vcvt.s32.f32 %v467
    %v532 = vcvt.s32.f32 %v468
    %v533 = vcvt.s32.f32 %v469
    %v534 = vcvt.s32.f32 %v470
    %v535 = vcvt.s32.f32 %v471
    %v536 = vcvt.s32.f32 %v472
    %v537 = vcvt.s32.f32 %v473
    %v538 = vcvt.s32.f32 %v474
    %v539 = vcvt.s32.f32 %v475
    %v540 = vcvt.s32.f32 %v476
    %v541 = vcvt.s32.f32 %v477
    %v542 = vadd.f32 %v268, %v478
    %v543 = vadd.f32 %v269, %v479
    %v544 = vadd.f32 %v270, %v480
    %v545 = vadd.f32 %v271, %v481
    %v546 = vadd.f32 %v272, %v482
    %v547 = vadd.f32 %v273, %v483
    %v548 = vadd.f32 %v274, %v484
    %v549 = vadd.f32 %v275, %v485
    %v550 = vadd.f32 %v276, %v486
    %v551 = vadd.f32 %v277, %v487
    %v552 = vadd.f32 %v278, %v488
    %v553 = vadd.f32 %v279, %v489
    %v554 = vadd.f32 %v280, %v490
    %v555 = vadd.f32 %v281, %v491
    %v556 = vadd.f32 %v282, %v492
    %v557 = vadd.f32 %v283, %v493
    %v558 = vadd.f32 %v284, %v494
    %v559 = vadd.f32 %v285, %v495
    %v560 = vadd.f32 %v286, %v496
    %v561 = vadd.f32 %v287, %v497
    %v562 = vadd.f32 %v288, %v498
    %v563 = vadd.f32 %v289, %v499
    %v564 = vadd.f32 %v290, %v500
    %v565 = vadd.f32 %v291, %v501
    %v566 = vadd.f32 %v292, %v502
    %v567 = vadd.f32 %v293, %v503
    %v568 = vadd.f32 %v294, %v504
    %v569 = vadd.f32 %v295, %v505
    %v570 = vadd.f32 %v296, %v506
    %v571 = vadd.f32 %v297, %v507
    %v572 = vadd.f32 %v298, %v508
    %v573 = vadd.f32 %v299, %v509
    %v574 = vadd.f32 %v300, %v510
    %v575 = vadd.f32 %v301, %v511
    %v576 = vadd.f32 %v302, %v512
    %v577 = vadd.f32 %v303, %v513
    %v578 = vadd.f32 %v304, %v514
    %v579 = vadd.f32 %v305, %v515
    %v580 = vadd.f32 %v306, %v516
    %v581 = vadd.f32 %v307, %v517
    %v582 = vadd.f32 %v308, %v518
    %v583 = vadd.f32 %v309, %v519
    %v584 = vadd.f32 %v310, %v520
    %v585 = vadd.f32 %v311, %v521
    %v586 = vadd.f32 %v312, %v522
    %v587 = vadd.f32 %v313, %v523
    %v588 = vadd.f32 %v314, %v524
    %v589 = vadd.f32 %v315, %v525
    %v590 = vadd.f32 %v316, %v526
    %v591 = vadd.f32 %v317, %v527
    %v592 = vadd.f32 %v318, %v528
    %v593 = vadd.f32 %v319, %v529
    %v594 = vadd.f32 %v320, %v530
    %v595 = vadd.f32 %v321, %v531
    %v596 = vadd.f32 %v322, %v532
    %v597 = vadd.f32 %v323, %v533
    %v598 = vadd.f32 %v324, %v534
    %v599 = vadd.f32 %v325, %v535
    %v600 = vadd.f32 %v326, %v536
    %v601 = vadd.f32 %v327, %v537
    %v602 = vadd.f32 %v328, %v538
    %v603 = vadd.f32 %v329, %v539
    %v604 = vadd.f32 %v330, %v540
    %v605 = vadd.f32 %v331, %v541
    %s606 = scalar_lea.vmem [#allocation3], 2
    %v607 = vld [vmem:[%s606] ss:$4 sm:$0xf]
    %v608 = vlaneseq
    %v609 = vshrl.u32 %v608, 7
    %v610 = vsub.s32 0, %v609
    %v611 = vrot.slane %v607, %v610
    %v612 = vlaneseq
    %v613 = vshrl.u32 %v612, 7
    %v614 = vsub.s32 1, %v613
    %v615 = vrot.slane %v607, %v614
    %v616 = vlaneseq
    %v617 = vshrl.u32 %v616, 7
    %v618 = vsub.s32 2, %v617
    %v619 = vrot.slane %v607, %v618
    %v620 = vlaneseq
    %v621 = vshrl.u32 %v620, 7
    %v622 = vsub.s32 3, %v621
    %v623 = vrot.slane %v607, %v622
    %vm624 = vcmp.eq.s32.totalorder %v43, %v611
    %vm625 = vcmp.eq.s32.totalorder %v43, %v615
    %vm626 = vcmp.eq.s32.totalorder %v43, %v619
    %vm627 = vcmp.eq.s32.totalorder %v43, %v623
    %vm628 = vcmp.eq.s32.totalorder %v44, %v611
    %vm629 = vcmp.eq.s32.totalorder %v44, %v615
    %vm630 = vcmp.eq.s32.totalorder %v44, %v619
    %vm631 = vcmp.eq.s32.totalorder %v44, %v623
    %vm632 = vcmp.eq.s32.totalorder %v45, %v611
    %vm633 = vcmp.eq.s32.totalorder %v45, %v615
    %vm634 = vcmp.eq.s32.totalorder %v45, %v619
    %vm635 = vcmp.eq.s32.totalorder %v45, %v623
    %vm636 = vcmp.eq.s32.totalorder %v46, %v611
    %vm637 = vcmp.eq.s32.totalorder %v46, %v615
    %vm638 = vcmp.eq.s32.totalorder %v46, %v619
    %vm639 = vcmp.eq.s32.totalorder %v46, %v623
    %vm640 = vcmp.eq.s32.totalorder %v47, %v611
    %vm641 = vcmp.eq.s32.totalorder %v47, %v615
    %vm642 = vcmp.eq.s32.totalorder %v47, %v619
    %vm643 = vcmp.eq.s32.totalorder %v47, %v623
    %vm644 = vcmp.eq.s32.totalorder %v48, %v611
    %vm645 = vcmp.eq.s32.totalorder %v48, %v615
    %vm646 = vcmp.eq.s32.totalorder %v48, %v619
    %vm647 = vcmp.eq.s32.totalorder %v48, %v623
    %vm648 = vcmp.eq.s32.totalorder %v49, %v611
    %vm649 = vcmp.eq.s32.totalorder %v49, %v615
    %vm650 = vcmp.eq.s32.totalorder %v49, %v619
    %vm651 = vcmp.eq.s32.totalorder %v49, %v623
    %vm652 = vcmp.eq.s32.totalorder %v50, %v611
    %vm653 = vcmp.eq.s32.totalorder %v50, %v615
    %vm654 = vcmp.eq.s32.totalorder %v50, %v619
    %vm655 = vcmp.eq.s32.totalorder %v50, %v623
    %vm656 = vcmp.eq.s32.totalorder %v51, %v611
    %vm657 = vcmp.eq.s32.totalorder %v51, %v615
    %vm658 = vcmp.eq.s32.totalorder %v51, %v619
    %vm659 = vcmp.eq.s32.totalorder %v51, %v623
    %vm660 = vcmp.eq.s32.totalorder %v52, %v611
    %vm661 = vcmp.eq.s32.totalorder %v52, %v615
    %vm662 = vcmp.eq.s32.totalorder %v52, %v619
    %vm663 = vcmp.eq.s32.totalorder %v52, %v623
    %vm664 = vcmp.eq.s32.totalorder %v53, %v611
    %vm665 = vcmp.eq.s32.totalorder %v53, %v615
    %vm666 = vcmp.eq.s32.totalorder %v53, %v619
    %vm667 = vcmp.eq.s32.totalorder %v53, %v623
    %vm668 = vcmp.eq.s32.totalorder %v54, %v611
    %vm669 = vcmp.eq.s32.totalorder %v54, %v615
    %vm670 = vcmp.eq.s32.totalorder %v54, %v619
    %vm671 = vcmp.eq.s32.totalorder %v54, %v623
    %vm672 = vcmp.eq.s32.totalorder %v55, %v611
    %vm673 = vcmp.eq.s32.totalorder %v55, %v615
    %vm674 = vcmp.eq.s32.totalorder %v55, %v619
    %vm675 = vcmp.eq.s32.totalorder %v55, %v623
    %vm676 = vcmp.eq.s32.totalorder %v56, %v611
    %vm677 = vcmp.eq.s32.totalorder %v56, %v615
    %vm678 = vcmp.eq.s32.totalorder %v56, %v619
    %vm679 = vcmp.eq.s32.totalorder %v56, %v623
    %vm680 = vcmp.eq.s32.totalorder %v57, %v611
    %vm681 = vcmp.eq.s32.totalorder %v57, %v615
    %vm682 = vcmp.eq.s32.totalorder %v57, %v619
    %vm683 = vcmp.eq.s32.totalorder %v57, %v623
    %vm684 = vcmp.eq.s32.totalorder %v58, %v611
    %vm685 = vcmp.eq.s32.totalorder %v58, %v615
    %vm686 = vcmp.eq.s32.totalorder %v58, %v619
    %vm687 = vcmp.eq.s32.totalorder %v58, %v623
    %v688 = vsel %vm624, 1, 0
    %v689 = vsel %vm625, 1, 0
    %v690 = vsel %vm626, 1, 0
    %v691 = vsel %vm627, 1, 0
    %v692 = vsel %vm628, 1, 0
    %v693 = vsel %vm629, 1, 0
    %v694 = vsel %vm630, 1, 0
    %v695 = vsel %vm631, 1, 0
    %v696 = vsel %vm632, 1, 0
    %v697 = vsel %vm633, 1, 0
    %v698 = vsel %vm634, 1, 0
    %v699 = vsel %vm635, 1, 0
    %v700 = vsel %vm636, 1, 0
    %v701 = vsel %vm637, 1, 0
    %v702 = vsel %vm638, 1, 0
    %v703 = vsel %vm639, 1, 0
    %v704 = vsel %vm640, 1, 0
    %v705 = vsel %vm641, 1, 0
    %v706 = vsel %vm642, 1, 0
    %v707 = vsel %vm643, 1, 0
    %v708 = vsel %vm644, 1, 0
    %v709 = vsel %vm645, 1, 0
    %v710 = vsel %vm646, 1, 0
    %v711 = vsel %vm647, 1, 0
    %v712 = vsel %vm648, 1, 0
    %v713 = vsel %vm649, 1, 0
    %v714 = vsel %vm650, 1, 0
    %v715 = vsel %vm651, 1, 0
    %v716 = vsel %vm652, 1, 0
    %v717 = vsel %vm653, 1, 0
    %v718 = vsel %vm654, 1, 0
    %v719 = vsel %vm655, 1, 0
    %v720 = vsel %vm656, 1, 0
    %v721 = vsel %vm657, 1, 0
    %v722 = vsel %vm658, 1, 0
    %v723 = vsel %vm659, 1, 0
    %v724 = vsel %vm660, 1, 0
    %v725 = vsel %vm661, 1, 0
    %v726 = vsel %vm662, 1, 0
    %v727 = vsel %vm663, 1, 0
    %v728 = vsel %vm664, 1, 0
    %v729 = vsel %vm665, 1, 0
    %v730 = vsel %vm666, 1, 0
    %v731 = vsel %vm667, 1, 0
    %v732 = vsel %vm668, 1, 0
    %v733 = vsel %vm669, 1, 0
    %v734 = vsel %vm670, 1, 0
    %v735 = vsel %vm671, 1, 0
    %v736 = vsel %vm672, 1, 0
    %v737 = vsel %vm673, 1, 0
    %v738 = vsel %vm674, 1, 0
    %v739 = vsel %vm675, 1, 0
    %v740 = vsel %vm676, 1, 0
    %v741 = vsel %vm677, 1, 0
    %v742 = vsel %vm678, 1, 0
    %v743 = vsel %vm679, 1, 0
    %v744 = vsel %vm680, 1, 0
    %v745 = vsel %vm681, 1, 0
    %v746 = vsel %vm682, 1, 0
    %v747 = vsel %vm683, 1, 0
    %v748 = vsel %vm684, 1, 0
    %v749 = vsel %vm685, 1, 0
    %v750 = vsel %vm686, 1, 0
    %v751 = vsel %vm687, 1, 0
    %v752 = vcvt.s32.f32 %v688
    %v753 = vcvt.s32.f32 %v689
    %v754 = vcvt.s32.f32 %v690
    %v755 = vcvt.s32.f32 %v691
    %v756 = vcvt.s32.f32 %v692
    %v757 = vcvt.s32.f32 %v693
    %v758 = vcvt.s32.f32 %v694
    %v759 = vcvt.s32.f32 %v695
    %v760 = vcvt.s32.f32 %v696
    %v761 = vcvt.s32.f32 %v697
    %v762 = vcvt.s32.f32 %v698
    %v763 = vcvt.s32.f32 %v699
    %v764 = vcvt.s32.f32 %v700
    %v765 = vcvt.s32.f32 %v701
    %v766 = vcvt.s32.f32 %v702
    %v767 = vcvt.s32.f32 %v703
    %v768 = vcvt.s32.f32 %v704
    %v769 = vcvt.s32.f32 %v705
    %v770 = vcvt.s32.f32 %v706
    %v771 = vcvt.s32.f32 %v707
    %v772 = vcvt.s32.f32 %v708
    %v773 = vcvt.s32.f32 %v709
    %v774 = vcvt.s32.f32 %v710
    %v775 = vcvt.s32.f32 %v711
    %v776 = vcvt.s32.f32 %v712
    %v777 = vcvt.s32.f32 %v713
    %v778 = vcvt.s32.f32 %v714
    %v779 = vcvt.s32.f32 %v715
    %v780 = vcvt.s32.f32 %v716
    %v781 = vcvt.s32.f32 %v717
    %v782 = vcvt.s32.f32 %v718
    %v783 = vcvt.s32.f32 %v719
    %v784 = vcvt.s32.f32 %v720
    %v785 = vcvt.s32.f32 %v721
    %v786 = vcvt.s32.f32 %v722
    %v787 = vcvt.s32.f32 %v723
    %v788 = vcvt.s32.f32 %v724
    %v789 = vcvt.s32.f32 %v725
    %v790 = vcvt.s32.f32 %v726
    %v791 = vcvt.s32.f32 %v727
    %v792 = vcvt.s32.f32 %v728
    %v793 = vcvt.s32.f32 %v729
    %v794 = vcvt.s32.f32 %v730
    %v795 = vcvt.s32.f32 %v731
    %v796 = vcvt.s32.f32 %v732
    %v797 = vcvt.s32.f32 %v733
    %v798 = vcvt.s32.f32 %v734
    %v799 = vcvt.s32.f32 %v735
    %v800 = vcvt.s32.f32 %v736
    %v801 = vcvt.s32.f32 %v737
    %v802 = vcvt.s32.f32 %v738
    %v803 = vcvt.s32.f32 %v739
    %v804 = vcvt.s32.f32 %v740
    %v805 = vcvt.s32.f32 %v741
    %v806 = vcvt.s32.f32 %v742
    %v807 = vcvt.s32.f32 %v743
    %v808 = vcvt.s32.f32 %v744
    %v809 = vcvt.s32.f32 %v745
    %v810 = vcvt.s32.f32 %v746
    %v811 = vcvt.s32.f32 %v747
    %v812 = vcvt.s32.f32 %v748
    %v813 = vcvt.s32.f32 %v749
    %v814 = vcvt.s32.f32 %v750
    %v815 = vcvt.s32.f32 %v751
    %v816 = vadd.f32 %v542, %v752
    %v817 = vadd.f32 %v543, %v753
    %v818 = vadd.f32 %v544, %v754
    %v819 = vadd.f32 %v545, %v755
    %v820 = vadd.f32 %v546, %v756
    %v821 = vadd.f32 %v547, %v757
    %v822 = vadd.f32 %v548, %v758
    %v823 = vadd.f32 %v549, %v759
    %v824 = vadd.f32 %v550, %v760
    %v825 = vadd.f32 %v551, %v761
    %v826 = vadd.f32 %v552, %v762
    %v827 = vadd.f32 %v553, %v763
    %v828 = vadd.f32 %v554, %v764
    %v829 = vadd.f32 %v555, %v765
    %v830 = vadd.f32 %v556, %v766
    %v831 = vadd.f32 %v557, %v767
    %v832 = vadd.f32 %v558, %v768
    %v833 = vadd.f32 %v559, %v769
    %v834 = vadd.f32 %v560, %v770
    %v835 = vadd.f32 %v561, %v771
    %v836 = vadd.f32 %v562, %v772
    %v837 = vadd.f32 %v563, %v773
    %v838 = vadd.f32 %v564, %v774
    %v839 = vadd.f32 %v565, %v775
    %v840 = vadd.f32 %v566, %v776
    %v841 = vadd.f32 %v567, %v777
    %v842 = vadd.f32 %v568, %v778
    %v843 = vadd.f32 %v569, %v779
    %v844 = vadd.f32 %v570, %v780
    %v845 = vadd.f32 %v571, %v781
    %v846 = vadd.f32 %v572, %v782
    %v847 = vadd.f32 %v573, %v783
    %v848 = vadd.f32 %v574, %v784
    %v849 = vadd.f32 %v575, %v785
    %v850 = vadd.f32 %v576, %v786
    %v851 = vadd.f32 %v577, %v787
    %v852 = vadd.f32 %v578, %v788
    %v853 = vadd.f32 %v579, %v789
    %v854 = vadd.f32 %v580, %v790
    %v855 = vadd.f32 %v581, %v791
    %v856 = vadd.f32 %v582, %v792
    %v857 = vadd.f32 %v583, %v793
    %v858 = vadd.f32 %v584, %v794
    %v859 = vadd.f32 %v585, %v795
    %v860 = vadd.f32 %v586, %v796
    %v861 = vadd.f32 %v587, %v797
    %v862 = vadd.f32 %v588, %v798
    %v863 = vadd.f32 %v589, %v799
    %v864 = vadd.f32 %v590, %v800
    %v865 = vadd.f32 %v591, %v801
    %v866 = vadd.f32 %v592, %v802
    %v867 = vadd.f32 %v593, %v803
    %v868 = vadd.f32 %v594, %v804
    %v869 = vadd.f32 %v595, %v805
    %v870 = vadd.f32 %v596, %v806
    %v871 = vadd.f32 %v597, %v807
    %v872 = vadd.f32 %v598, %v808
    %v873 = vadd.f32 %v599, %v809
    %v874 = vadd.f32 %v600, %v810
    %v875 = vadd.f32 %v601, %v811
    %v876 = vadd.f32 %v602, %v812
    %v877 = vadd.f32 %v603, %v813
    %v878 = vadd.f32 %v604, %v814
    %v879 = vadd.f32 %v605, %v815
    %s880 = scalar_lea.vmem [#allocation3], 3
    %v881 = vld [vmem:[%s880] ss:$4 sm:$0xf]
    %v882 = vlaneseq
    %v883 = vshrl.u32 %v882, 7
    %v884 = vsub.s32 0, %v883
    %v885 = vrot.slane %v881, %v884
    %v886 = vlaneseq
    %v887 = vshrl.u32 %v886, 7
    %v888 = vsub.s32 1, %v887
    %v889 = vrot.slane %v881, %v888
    %v890 = vlaneseq
    %v891 = vshrl.u32 %v890, 7
    %v892 = vsub.s32 2, %v891
    %v893 = vrot.slane %v881, %v892
    %v894 = vlaneseq
    %v895 = vshrl.u32 %v894, 7
    %v896 = vsub.s32 3, %v895
    %v897 = vrot.slane %v881, %v896
    %vm898 = vcmp.eq.s32.totalorder %v43, %v885
    %vm899 = vcmp.eq.s32.totalorder %v43, %v889
    %vm900 = vcmp.eq.s32.totalorder %v43, %v893
    %vm901 = vcmp.eq.s32.totalorder %v43, %v897
    %vm902 = vcmp.eq.s32.totalorder %v44, %v885
    %vm903 = vcmp.eq.s32.totalorder %v44, %v889
    %vm904 = vcmp.eq.s32.totalorder %v44, %v893
    %vm905 = vcmp.eq.s32.totalorder %v44, %v897
    %vm906 = vcmp.eq.s32.totalorder %v45, %v885
    %vm907 = vcmp.eq.s32.totalorder %v45, %v889
    %vm908 = vcmp.eq.s32.totalorder %v45, %v893
    %vm909 = vcmp.eq.s32.totalorder %v45, %v897
    %vm910 = vcmp.eq.s32.totalorder %v46, %v885
    %vm911 = vcmp.eq.s32.totalorder %v46, %v889
    %vm912 = vcmp.eq.s32.totalorder %v46, %v893
    %vm913 = vcmp.eq.s32.totalorder %v46, %v897
    %vm914 = vcmp.eq.s32.totalorder %v47, %v885
    %vm915 = vcmp.eq.s32.totalorder %v47, %v889
    %vm916 = vcmp.eq.s32.totalorder %v47, %v893
    %vm917 = vcmp.eq.s32.totalorder %v47, %v897
    %vm918 = vcmp.eq.s32.totalorder %v48, %v885
    %vm919 = vcmp.eq.s32.totalorder %v48, %v889
    %vm920 = vcmp.eq.s32.totalorder %v48, %v893
    %vm921 = vcmp.eq.s32.totalorder %v48, %v897
    %vm922 = vcmp.eq.s32.totalorder %v49, %v885
    %vm923 = vcmp.eq.s32.totalorder %v49, %v889
    %vm924 = vcmp.eq.s32.totalorder %v49, %v893
    %vm925 = vcmp.eq.s32.totalorder %v49, %v897
    %vm926 = vcmp.eq.s32.totalorder %v50, %v885
    %vm927 = vcmp.eq.s32.totalorder %v50, %v889
    %vm928 = vcmp.eq.s32.totalorder %v50, %v893
    %vm929 = vcmp.eq.s32.totalorder %v50, %v897
    %vm930 = vcmp.eq.s32.totalorder %v51, %v885
    %vm931 = vcmp.eq.s32.totalorder %v51, %v889
    %vm932 = vcmp.eq.s32.totalorder %v51, %v893
    %vm933 = vcmp.eq.s32.totalorder %v51, %v897
    %vm934 = vcmp.eq.s32.totalorder %v52, %v885
    %vm935 = vcmp.eq.s32.totalorder %v52, %v889
    %vm936 = vcmp.eq.s32.totalorder %v52, %v893
    %vm937 = vcmp.eq.s32.totalorder %v52, %v897
    %vm938 = vcmp.eq.s32.totalorder %v53, %v885
    %vm939 = vcmp.eq.s32.totalorder %v53, %v889
    %vm940 = vcmp.eq.s32.totalorder %v53, %v893
    %vm941 = vcmp.eq.s32.totalorder %v53, %v897
    %vm942 = vcmp.eq.s32.totalorder %v54, %v885
    %vm943 = vcmp.eq.s32.totalorder %v54, %v889
    %vm944 = vcmp.eq.s32.totalorder %v54, %v893
    %vm945 = vcmp.eq.s32.totalorder %v54, %v897
    %vm946 = vcmp.eq.s32.totalorder %v55, %v885
    %vm947 = vcmp.eq.s32.totalorder %v55, %v889
    %vm948 = vcmp.eq.s32.totalorder %v55, %v893
    %vm949 = vcmp.eq.s32.totalorder %v55, %v897
    %vm950 = vcmp.eq.s32.totalorder %v56, %v885
    %vm951 = vcmp.eq.s32.totalorder %v56, %v889
    %vm952 = vcmp.eq.s32.totalorder %v56, %v893
    %vm953 = vcmp.eq.s32.totalorder %v56, %v897
    %vm954 = vcmp.eq.s32.totalorder %v57, %v885
    %vm955 = vcmp.eq.s32.totalorder %v57, %v889
    %vm956 = vcmp.eq.s32.totalorder %v57, %v893
    %vm957 = vcmp.eq.s32.totalorder %v57, %v897
    %vm958 = vcmp.eq.s32.totalorder %v58, %v885
    %vm959 = vcmp.eq.s32.totalorder %v58, %v889
    %vm960 = vcmp.eq.s32.totalorder %v58, %v893
    %vm961 = vcmp.eq.s32.totalorder %v58, %v897
    %v962 = vsel %vm898, 1, 0
    %v963 = vsel %vm899, 1, 0
    %v964 = vsel %vm900, 1, 0
    %v965 = vsel %vm901, 1, 0
    %v966 = vsel %vm902, 1, 0
    %v967 = vsel %vm903, 1, 0
    %v968 = vsel %vm904, 1, 0
    %v969 = vsel %vm905, 1, 0
    %v970 = vsel %vm906, 1, 0
    %v971 = vsel %vm907, 1, 0
    %v972 = vsel %vm908, 1, 0
    %v973 = vsel %vm909, 1, 0
    %v974 = vsel %vm910, 1, 0
    %v975 = vsel %vm911, 1, 0
    %v976 = vsel %vm912, 1, 0
    %v977 = vsel %vm913, 1, 0
    %v978 = vsel %vm914, 1, 0
    %v979 = vsel %vm915, 1, 0
    %v980 = vsel %vm916, 1, 0
    %v981 = vsel %vm917, 1, 0
    %v982 = vsel %vm918, 1, 0
    %v983 = vsel %vm919, 1, 0
    %v984 = vsel %vm920, 1, 0
    %v985 = vsel %vm921, 1, 0
    %v986 = vsel %vm922, 1, 0
    %v987 = vsel %vm923, 1, 0
    %v988 = vsel %vm924, 1, 0
    %v989 = vsel %vm925, 1, 0
    %v990 = vsel %vm926, 1, 0
    %v991 = vsel %vm927, 1, 0
    %v992 = vsel %vm928, 1, 0
    %v993 = vsel %vm929, 1, 0
    %v994 = vsel %vm930, 1, 0
    %v995 = vsel %vm931, 1, 0
    %v996 = vsel %vm932, 1, 0
    %v997 = vsel %vm933, 1, 0
    %v998 = vsel %vm934, 1, 0
    %v999 = vsel %vm935, 1, 0
    %v1000 = vsel %vm936, 1, 0
    %v1001 = vsel %vm937, 1, 0
    %v1002 = vsel %vm938, 1, 0
    %v1003 = vsel %vm939, 1, 0
    %v1004 = vsel %vm940, 1, 0
    %v1005 = vsel %vm941, 1, 0
    %v1006 = vsel %vm942, 1, 0
    %v1007 = vsel %vm943, 1, 0
    %v1008 = vsel %vm944, 1, 0
    %v1009 = vsel %vm945, 1, 0
    %v1010 = vsel %vm946, 1, 0
    %v1011 = vsel %vm947, 1, 0
    %v1012 = vsel %vm948, 1, 0
    %v1013 = vsel %vm949, 1, 0
    %v1014 = vsel %vm950, 1, 0
    %v1015 = vsel %vm951, 1, 0
    %v1016 = vsel %vm952, 1, 0
    %v1017 = vsel %vm953, 1, 0
    %v1018 = vsel %vm954, 1, 0
    %v1019 = vsel %vm955, 1, 0
    %v1020 = vsel %vm956, 1, 0
    %v1021 = vsel %vm957, 1, 0
    %v1022 = vsel %vm958, 1, 0
    %v1023 = vsel %vm959, 1, 0
    %v1024 = vsel %vm960, 1, 0
    %v1025 = vsel %vm961, 1, 0
    %v1026 = vcvt.s32.f32 %v962
    %v1027 = vcvt.s32.f32 %v963
    %v1028 = vcvt.s32.f32 %v964
    %v1029 = vcvt.s32.f32 %v965
    %v1030 = vcvt.s32.f32 %v966
    %v1031 = vcvt.s32.f32 %v967
    %v1032 = vcvt.s32.f32 %v968
    %v1033 = vcvt.s32.f32 %v969
    %v1034 = vcvt.s32.f32 %v970
    %v1035 = vcvt.s32.f32 %v971
    %v1036 = vcvt.s32.f32 %v972
    %v1037 = vcvt.s32.f32 %v973
    %v1038 = vcvt.s32.f32 %v974
    %v1039 = vcvt.s32.f32 %v975
    %v1040 = vcvt.s32.f32 %v976
    %v1041 = vcvt.s32.f32 %v977
    %v1042 = vcvt.s32.f32 %v978
    %v1043 = vcvt.s32.f32 %v979
    %v1044 = vcvt.s32.f32 %v980
    %v1045 = vcvt.s32.f32 %v981
    %v1046 = vcvt.s32.f32 %v982
    %v1047 = vcvt.s32.f32 %v983
    %v1048 = vcvt.s32.f32 %v984
    %v1049 = vcvt.s32.f32 %v985
    %v1050 = vcvt.s32.f32 %v986
    %v1051 = vcvt.s32.f32 %v987
    %v1052 = vcvt.s32.f32 %v988
    %v1053 = vcvt.s32.f32 %v989
    %v1054 = vcvt.s32.f32 %v990
    %v1055 = vcvt.s32.f32 %v991
    %v1056 = vcvt.s32.f32 %v992
    %v1057 = vcvt.s32.f32 %v993
    %v1058 = vcvt.s32.f32 %v994
    %v1059 = vcvt.s32.f32 %v995
    %v1060 = vcvt.s32.f32 %v996
    %v1061 = vcvt.s32.f32 %v997
    %v1062 = vcvt.s32.f32 %v998
    %v1063 = vcvt.s32.f32 %v999
    %v1064 = vcvt.s32.f32 %v1000
    %v1065 = vcvt.s32.f32 %v1001
    %v1066 = vcvt.s32.f32 %v1002
    %v1067 = vcvt.s32.f32 %v1003
    %v1068 = vcvt.s32.f32 %v1004
    %v1069 = vcvt.s32.f32 %v1005
    %v1070 = vcvt.s32.f32 %v1006
    %v1071 = vcvt.s32.f32 %v1007
    %v1072 = vcvt.s32.f32 %v1008
    %v1073 = vcvt.s32.f32 %v1009
    %v1074 = vcvt.s32.f32 %v1010
    %v1075 = vcvt.s32.f32 %v1011
    %v1076 = vcvt.s32.f32 %v1012
    %v1077 = vcvt.s32.f32 %v1013
    %v1078 = vcvt.s32.f32 %v1014
    %v1079 = vcvt.s32.f32 %v1015
    %v1080 = vcvt.s32.f32 %v1016
    %v1081 = vcvt.s32.f32 %v1017
    %v1082 = vcvt.s32.f32 %v1018
    %v1083 = vcvt.s32.f32 %v1019
    %v1084 = vcvt.s32.f32 %v1020
    %v1085 = vcvt.s32.f32 %v1021
    %v1086 = vcvt.s32.f32 %v1022
    %v1087 = vcvt.s32.f32 %v1023
    %v1088 = vcvt.s32.f32 %v1024
    %v1089 = vcvt.s32.f32 %v1025
    %v1090 = vadd.f32 %v816, %v1026
    %v1091 = vadd.f32 %v817, %v1027
    %v1092 = vadd.f32 %v818, %v1028
    %v1093 = vadd.f32 %v819, %v1029
    %v1094 = vadd.f32 %v820, %v1030
    %v1095 = vadd.f32 %v821, %v1031
    %v1096 = vadd.f32 %v822, %v1032
    %v1097 = vadd.f32 %v823, %v1033
    %v1098 = vadd.f32 %v824, %v1034
    %v1099 = vadd.f32 %v825, %v1035
    %v1100 = vadd.f32 %v826, %v1036
    %v1101 = vadd.f32 %v827, %v1037
    %v1102 = vadd.f32 %v828, %v1038
    %v1103 = vadd.f32 %v829, %v1039
    %v1104 = vadd.f32 %v830, %v1040
    %v1105 = vadd.f32 %v831, %v1041
    %v1106 = vadd.f32 %v832, %v1042
    %v1107 = vadd.f32 %v833, %v1043
    %v1108 = vadd.f32 %v834, %v1044
    %v1109 = vadd.f32 %v835, %v1045
    %v1110 = vadd.f32 %v836, %v1046
    %v1111 = vadd.f32 %v837, %v1047
    %v1112 = vadd.f32 %v838, %v1048
    %v1113 = vadd.f32 %v839, %v1049
    %v1114 = vadd.f32 %v840, %v1050
    %v1115 = vadd.f32 %v841, %v1051
    %v1116 = vadd.f32 %v842, %v1052
    %v1117 = vadd.f32 %v843, %v1053
    %v1118 = vadd.f32 %v844, %v1054
    %v1119 = vadd.f32 %v845, %v1055
    %v1120 = vadd.f32 %v846, %v1056
    %v1121 = vadd.f32 %v847, %v1057
    %v1122 = vadd.f32 %v848, %v1058
    %v1123 = vadd.f32 %v849, %v1059
    %v1124 = vadd.f32 %v850, %v1060
    %v1125 = vadd.f32 %v851, %v1061
    %v1126 = vadd.f32 %v852, %v1062
    %v1127 = vadd.f32 %v853, %v1063
    %v1128 = vadd.f32 %v854, %v1064
    %v1129 = vadd.f32 %v855, %v1065
    %v1130 = vadd.f32 %v856, %v1066
    %v1131 = vadd.f32 %v857, %v1067
    %v1132 = vadd.f32 %v858, %v1068
    %v1133 = vadd.f32 %v859, %v1069
    %v1134 = vadd.f32 %v860, %v1070
    %v1135 = vadd.f32 %v861, %v1071
    %v1136 = vadd.f32 %v862, %v1072
    %v1137 = vadd.f32 %v863, %v1073
    %v1138 = vadd.f32 %v864, %v1074
    %v1139 = vadd.f32 %v865, %v1075
    %v1140 = vadd.f32 %v866, %v1076
    %v1141 = vadd.f32 %v867, %v1077
    %v1142 = vadd.f32 %v868, %v1078
    %v1143 = vadd.f32 %v869, %v1079
    %v1144 = vadd.f32 %v870, %v1080
    %v1145 = vadd.f32 %v871, %v1081
    %v1146 = vadd.f32 %v872, %v1082
    %v1147 = vadd.f32 %v873, %v1083
    %v1148 = vadd.f32 %v874, %v1084
    %v1149 = vadd.f32 %v875, %v1085
    %v1150 = vadd.f32 %v876, %v1086
    %v1151 = vadd.f32 %v877, %v1087
    %v1152 = vadd.f32 %v878, %v1088
    %v1153 = vadd.f32 %v879, %v1089
    %v1154 = vld [vmem:[#allocation6] sm:$0xff]
    %v1155 = vld [vmem:[#allocation6 + $0x8] sm:$0xff]
    %v1156 = vld [vmem:[#allocation6 + $0x10] sm:$0xff]
    %1157 = vmatprep.subr.mxu0 %v1091
    %1158 = vmatpush1.msra.mxu0 %v1090
    %1159 = vmatprep.subr.mxu0 %v1095
    %1160 = vmatpush1.msra.mxu0 %v1094
    %1161 = vmatprep.subr.mxu0 %v1099
    %1162 = vmatpush1.msra.mxu0 %v1098
    %1163 = vmatprep.subr.mxu0 %v1103
    %1164 = vmatpush1.msra.mxu0 %v1102
    %1165 = vmatprep.subr.mxu0 %v1107
    %1166 = vmatpush1.msra.mxu0 %v1106
    %1167 = vmatprep.subr.mxu0 %v1111
    %1168 = vmatpush1.msra.mxu0 %v1110
    %1169 = vmatprep.subr.mxu0 %v1115
    %1170 = vmatpush1.msra.mxu0 %v1114
    %1171 = vmatprep.subr.mxu0 %v1119
    %1172 = vmatpush1.msra.mxu0 %v1118
    %1173 = vmatprep.subr.mxu0 %v1123
    %1174 = vmatpush1.msra.mxu0 %v1122
    %1175 = vmatprep.subr.mxu0 %v1127
    %1176 = vmatpush1.msra.mxu0 %v1126
    %1177 = vmatprep.subr.mxu0 %v1131
    %1178 = vmatpush1.msra.mxu0 %v1130
    %1179 = vmatprep.subr.mxu0 %v1135
    %1180 = vmatpush1.msra.mxu0 %v1134
    %1181 = vmatprep.subr.mxu0 %v1139
    %1182 = vmatpush1.msra.mxu0 %v1138
    %1183 = vmatprep.subr.mxu0 %v1143
    %1184 = vmatpush1.msra.mxu0 %v1142
    %1185 = vmatprep.subr.mxu0 %v1147
    %1186 = vmatpush1.msra.mxu0 %v1146
    %1187 = vmatprep.subr.mxu0 %v1151
    %1188 = vmatpush1.msra.mxu0 %v1150
    %1189 = vmatprep.subr.mxu0 0.0
    %1190 = vmatpush1.msra.mxu0 0.0
    %1191 = vmatprep.subr.mxu0 0.0
    %1192 = vmatpush1.msra.mxu0 0.0
    %1193 = vmatprep.subr.mxu0 0.0
    %1194 = vmatpush1.msra.mxu0 0.0
    %1195 = vmatprep.subr.mxu0 0.0
    %1196 = vmatpush1.msra.mxu0 0.0
    %1197 = vmatprep.subr.mxu0 0.0
    %1198 = vmatpush1.msra.mxu0 0.0
    %1199 = vmatprep.subr.mxu0 0.0
    %1200 = vmatpush1.msra.mxu0 0.0
    %1201 = vmatprep.subr.mxu0 0.0
    %1202 = vmatpush1.msra.mxu0 0.0
    %1203 = vmatprep.subr.mxu0 0.0
    %1204 = vmatpush1.msra.mxu0 0.0
    %1205 = vmatprep.subr.mxu0 0.0
    %1206 = vmatpush1.msra.mxu0 0.0
    %1207 = vmatprep.subr.mxu0 0.0
    %1208 = vmatpush1.msra.mxu0 0.0
    %1209 = vmatprep.subr.mxu0 0.0
    %1210 = vmatpush1.msra.mxu0 0.0
    %1211 = vmatprep.subr.mxu0 0.0
    %1212 = vmatpush1.msra.mxu0 0.0
    %1213 = vmatprep.subr.mxu0 0.0
    %1214 = vmatpush1.msra.mxu0 0.0
    %1215 = vmatprep.subr.mxu0 0.0
    %1216 = vmatpush1.msra.mxu0 0.0
    %1217 = vmatprep.subr.mxu0 0.0
    %1218 = vmatpush1.msra.mxu0 0.0
    %1219 = vmatprep.subr.mxu0 0.0
    %1220 = vmatpush1.msra.mxu0 0.0
    %1221 = vmatprep.mubr.f32.mxu0 0.0
    %1222 = vmatmul.mubr.f32.gmra.mrb[0].mxu0 %v1154
    %v1223 = vpop.f32.mrb[0].mxu0
    %v1224 = vadd.f32 0.0, %v1223
    %v1225 = vpop.f32.mrb[0].mxu0
    %v1226 = vadd.f32 0.0, %v1225
    %1227 = vmatprep.mubr.f32.mxu0 0.0
    %1228 = vmatmul.mubr.f32.gmra.mrb[0].mxu0 %v1155
    %v1229 = vpop.f32.mrb[0].mxu0
    %v1230 = vadd.f32 0.0, %v1229
    %v1231 = vpop.f32.mrb[0].mxu0
    %v1232 = vadd.f32 0.0, %v1231
    %1233 = vmatprep.mubr.f32.mxu0 0.0
    %1234 = vmatmul.mubr.f32.gmra.mrb[0].mxu0 %v1156
    %v1235 = vpop.f32.mrb[0].mxu0
    %v1236 = vadd.f32 0.0, %v1235
    %v1237 = vpop.f32.mrb[0].mxu0
    %v1238 = vadd.f32 0.0, %v1237
    %1239 = vdwg.mxu0
    %1240 = vmatprep.subr.mxu0 %v1093
    %1241 = vmatpush1.msra.mxu0 %v1092
    %1242 = vmatprep.subr.mxu0 %v1097
    %1243 = vmatpush1.msra.mxu0 %v1096
    %1244 = vmatprep.subr.mxu0 %v1101
    %1245 = vmatpush1.msra.mxu0 %v1100
    %1246 = vmatprep.subr.mxu0 %v1105
    %1247 = vmatpush1.msra.mxu0 %v1104
    %1248 = vmatprep.subr.mxu0 %v1109
    %1249 = vmatpush1.msra.mxu0 %v1108
    %1250 = vmatprep.subr.mxu0 %v1113
    %1251 = vmatpush1.msra.mxu0 %v1112
    %1252 = vmatprep.subr.mxu0 %v1117
    %1253 = vmatpush1.msra.mxu0 %v1116
    %1254 = vmatprep.subr.mxu0 %v1121
    %1255 = vmatpush1.msra.mxu0 %v1120
    %1256 = vmatprep.subr.mxu0 %v1125
    %1257 = vmatpush1.msra.mxu0 %v1124
    %1258 = vmatprep.subr.mxu0 %v1129
    %1259 = vmatpush1.msra.mxu0 %v1128
    %1260 = vmatprep.subr.mxu0 %v1133
    %1261 = vmatpush1.msra.mxu0 %v1132
    %1262 = vmatprep.subr.mxu0 %v1137
    %1263 = vmatpush1.msra.mxu0 %v1136
    %1264 = vmatprep.subr.mxu0 %v1141
    %1265 = vmatpush1.msra.mxu0 %v1140
    %1266 = vmatprep.subr.mxu0 %v1145
    %1267 = vmatpush1.msra.mxu0 %v1144
    %1268 = vmatprep.subr.mxu0 %v1149
    %1269 = vmatpush1.msra.mxu0 %v1148
    %1270 = vmatprep.subr.mxu0 %v1153
    %1271 = vmatpush1.msra.mxu0 %v1152
    %1272 = vmatprep.subr.mxu0 0.0
    %1273 = vmatpush1.msra.mxu0 0.0
    %1274 = vmatprep.subr.mxu0 0.0
    %1275 = vmatpush1.msra.mxu0 0.0
    %1276 = vmatprep.subr.mxu0 0.0
    %1277 = vmatpush1.msra.mxu0 0.0
    %1278 = vmatprep.subr.mxu0 0.0
    %1279 = vmatpush1.msra.mxu0 0.0
    %1280 = vmatprep.subr.mxu0 0.0
    %1281 = vmatpush1.msra.mxu0 0.0
    %1282 = vmatprep.subr.mxu0 0.0
    %1283 = vmatpush1.msra.mxu0 0.0
    %1284 = vmatprep.subr.mxu0 0.0
    %1285 = vmatpush1.msra.mxu0 0.0
    %1286 = vmatprep.subr.mxu0 0.0
    %1287 = vmatpush1.msra.mxu0 0.0
    %1288 = vmatprep.subr.mxu0 0.0
    %1289 = vmatpush1.msra.mxu0 0.0
    %1290 = vmatprep.subr.mxu0 0.0
    %1291 = vmatpush1.msra.mxu0 0.0
    %1292 = vmatprep.subr.mxu0 0.0
    %1293 = vmatpush1.msra.mxu0 0.0
    %1294 = vmatprep.subr.mxu0 0.0
    %1295 = vmatpush1.msra.mxu0 0.0
    %1296 = vmatprep.subr.mxu0 0.0
    %1297 = vmatpush1.msra.mxu0 0.0
    %1298 = vmatprep.subr.mxu0 0.0
    %1299 = vmatpush1.msra.mxu0 0.0
    %1300 = vmatprep.subr.mxu0 0.0
    %1301 = vmatpush1.msra.mxu0 0.0
    %1302 = vmatprep.subr.mxu0 0.0
    %1303 = vmatpush1.msra.mxu0 0.0
    %1304 = vmatprep.mubr.f32.mxu0 0.0
    %1305 = vmatmul.mubr.f32.gmra.mrb[0].mxu0 %v1154
    %v1306 = vpop.f32.mrb[0].mxu0
    %v1307 = vadd.f32 0.0, %v1306
    %v1308 = vpop.f32.mrb[0].mxu0
    %v1309 = vadd.f32 0.0, %v1308
    %1310 = vmatprep.mubr.f32.mxu0 0.0
    %1311 = vmatmul.mubr.f32.gmra.mrb[0].mxu0 %v1155
    %v1312 = vpop.f32.mrb[0].mxu0
    %v1313 = vadd.f32 0.0, %v1312
    %v1314 = vpop.f32.mrb[0].mxu0
    %v1315 = vadd.f32 0.0, %v1314
    %1316 = vmatprep.mubr.f32.mxu0 0.0
    %1317 = vmatmul.mubr.f32.gmra.mrb[0].mxu0 %v1156
    %v1318 = vpop.f32.mrb[0].mxu0
    %v1319 = vadd.f32 0.0, %v1318
    %v1320 = vpop.f32.mrb[0].mxu0
    %v1321 = vadd.f32 0.0, %v1320
    %1322 = vdwg.mxu0
    %v1323 = vmul.f32 %v1224, %v1224
    %v1324 = vmul.f32 %v1226, %v1226
    %v1325 = vmul.f32 %v1307, %v1307
    %v1326 = vmul.f32 %v1309, %v1309
    %v1327 = vmul.f32 %v1230, %v1230
    %v1328 = vmul.f32 %v1232, %v1232
    %v1329 = vmul.f32 %v1313, %v1313
    %v1330 = vmul.f32 %v1315, %v1315
    %v1331 = vadd.f32 %v1323, %v1327
    %v1332 = vrot.slane %v1331, 4
    %v1333 = vadd.f32 %v1331, %v1332
    %v1334 = vrot.slane %v1333, 2
    %v1335 = vadd.f32 %v1333, %v1334
    %v1336 = vrot.slane %v1335, 1
    %v1337 = vadd.f32 %v1335, %v1336
    %v1338 = vadd.f32 %v1324, %v1328
    %v1339 = vrot.slane %v1338, 4
    %v1340 = vadd.f32 %v1338, %v1339
    %v1341 = vrot.slane %v1340, 2
    %v1342 = vadd.f32 %v1340, %v1341
    %v1343 = vrot.slane %v1342, 1
    %v1344 = vadd.f32 %v1342, %v1343
    %v1345 = vadd.f32 %v1325, %v1329
    %v1346 = vrot.slane %v1345, 4
    %v1347 = vadd.f32 %v1345, %v1346
    %v1348 = vrot.slane %v1347, 2
    %v1349 = vadd.f32 %v1347, %v1348
    %v1350 = vrot.slane %v1349, 1
    %v1351 = vadd.f32 %v1349, %v1350
    %v1352 = vadd.f32 %v1326, %v1330
    %v1353 = vrot.slane %v1352, 4
    %v1354 = vadd.f32 %v1352, %v1353
    %v1355 = vrot.slane %v1354, 2
    %v1356 = vadd.f32 %v1354, %v1355
    %v1357 = vrot.slane %v1356, 1
    %v1358 = vadd.f32 %v1356, %v1357
    %v1359 = vsub.f32 %v1337, %v1236
    %v1360 = vsub.f32 %v1344, %v1238
    %v1361 = vsub.f32 %v1351, %v1319
    %v1362 = vsub.f32 %v1358, %v1321
    %v1363 = vmul.f32 %v1359, 0.5
    %v1364 = vmul.f32 %v1360, 0.5
    %v1365 = vmul.f32 %v1361, 0.5
    %v1366 = vmul.f32 %v1362, 0.5
    %v1371 = vrot.slane %v1363, 7
    %v1372 = vrot.slane %v1364, 7
    %v1373 = vrot.slane %v1365, 7
    %v1374 = vrot.slane %v1366, 7
    %v1379 = vadd.f32 %v1236, %v1371
    %v1380 = vadd.f32 %v1238, %v1372
    %v1381 = vadd.f32 %v1319, %v1373
    %v1382 = vadd.f32 %v1321, %v1374
    %s1383 = sld [smem:[#allocation2]]
    %v1384 = vstv %s1383
    %v1385 = vadd.f32 %v1379, %v1384
    %v1386 = vadd.f32 %v1380, %v1384
    %v1387 = vadd.f32 %v1381, %v1384
    %v1388 = vadd.f32 %v1382, %v1384
    %v1389 = vxor.u32 %v1385, 2147483648
    %v1390 = vxor.u32 %v1386, 2147483648
    %v1391 = vxor.u32 %v1387, 2147483648
    %v1392 = vxor.u32 %v1388, 2147483648
    %v1393 = vmul.f32 %v1389, 1.442695
    %v1394 = vpow.pop %v1393
    %v1395 = vmul.f32 %v1390, 1.442695
    %v1396 = vpow.pop %v1395
    %v1397 = vmul.f32 %v1391, 1.442695
    %v1398 = vpow.pop %v1397
    %v1399 = vmul.f32 %v1392, 1.442695
    %v1400 = vpow.pop %v1399
    %v1401 = vadd.f32 %v1394, 1.0
    %v1402 = vadd.f32 %v1396, 1.0
    %v1403 = vadd.f32 %v1398, 1.0
    %v1404 = vadd.f32 %v1400, 1.0
    %v1405 = vrcp.pop %v1401
    %v1406 = vmul.f32 1.0, %v1405
    %v1407 = vrcp.pop %v1402
    %v1408 = vmul.f32 1.0, %v1407
    %v1409 = vrcp.pop %v1403
    %v1410 = vmul.f32 1.0, %v1409
    %v1411 = vrcp.pop %v1404
    %v1412 = vmul.f32 1.0, %v1411
    %v1417 = vcombine.low %v1406, %v1408
    %v1418 = vcombine.low %v1410, %v1412
    %v1420 = vunpack.c.l.s4 1966171168
    %v1421 = vunpack.c.0.s8 %v1420
    %v1422 = vlaneseq
    %v1423 = vshrl.u32 %v1422, 7
    %v1424 = vsub.s32 %v1421, %v1423
    %v1425 = vrot.slane %v1417, %v1424
    %v1427 = vunpack.c.l.s4 1966171168
    %v1428 = vunpack.c.0.s8 %v1427
    %v1429 = vlaneseq
    %v1430 = vshrl.u32 %v1429, 7
    %v1431 = vsub.s32 %v1428, %v1430
    %v1432 = vrot.slane %v1418, %v1431
    %v1433 = vcombine.high %v1425, %v1432
    %v1435 = vunpack.c.l.s4 1966171168
    %v1436 = vunpack.c.0.s8 %v1435
    %v1437 = vlaneseq
    %v1438 = vshrl.u32 %v1437, 7
    %v1439 = vsub.s32 %v1436, %v1438
    %v1440 = vrot.slane %v1433, %v1439
    %v1442 = vlaneseq
    %vm1443 = vcmp.ge.s32.totalorder %v1442, 0
    %vm1444 = vcmp.lt.s32.totalorder %v1442, 512
    %vm1445 = vmand %vm1443, %vm1444
    %1446 = vst.msk [vmem:[#allocation8] sm:$0xf] %vm1445, %v1440
    // Predicated region
    $region22: #{tpu_custom_call.1} parent=1 // pred_check
      _
    $region23: #{tpu_custom_call.1} parent=1 // pred_check_branch
      %1448 = sbr.rel (0) target = $region25
    $region24: #{tpu_custom_call.1} parent=1 // pred_region
      %s1450 = ssub.s32 64, 64
      %1451 = vsyncadd [#allocation5], %s1450
      %s1453 = sshll.u32 [#allocation8], 4
      %s1454 = int_to_ptr.vmem [resolvable:$true] %s1453
      %1456 = dma.vmem_to_hbm [thread:$0]  %s1454, 64, %s3, [#allocation5]
    $region25: #{tpu_custom_call.1} parent=1 // pred_fallthru
      _
    // Predicated region
    $region26: #{tpu_custom_call.1} parent=1 // pred_check
      _
    $region27: #{tpu_custom_call.1} parent=1 // pred_check_branch
      %1458 = sbr.rel (0) target = $region29
    $region28: #{tpu_custom_call.1} parent=1 // pred_region
      %1459 = dma.done [#allocation5], 64
    $region29: #{tpu_custom_call.1} parent=1 // pred_fallthru
      _
    %1460 = vsyncpa [#allocation4], 1
    %1461 = vsyncpa [#allocation7], 1
    %1462 = vsyncpa [#allocation5], 1

</llo_original>
